<compile_context>
chip_gen: v7x
topology: tpu7x:2x2x1
jax: 0.10.0
libtpu: 0.0.40
codegen_flags: <defaults>
</compile_context>

<pallas_src>
import numpy as np

import jax
import jax.numpy as jnp
from jax import lax
from jax.experimental import pallas as pl
from jax.experimental.pallas import tpu as pltpu


def _round_up(n: int, m: int) -> int:
    return ((n + m - 1) // m) * m


def _choose_tn(tn: int, n_tokens: int, batch: int) -> int:
    """Pick a token-tile size: lane-dense, VMEM-friendly, megacore-aware."""
    if n_tokens <= 128:
        # Full-extent block (block dim == array dim is always legal).
        return n_tokens
    tn = max(128, min(tn, _round_up(n_tokens, 128)))
    tn = _round_up(tn, 128)
    # v7x has 2 TensorCores; make sure there are >= 2 grid steps for B == 1.
    if batch == 1 and pl.cdiv(n_tokens, tn) < 2:
        tn = max(128, _round_up(pl.cdiv(n_tokens, 2), 128))
    return tn


# -----------------------------------------------------------------------------
# Kernels
# -----------------------------------------------------------------------------

def _embed_nchw_kernel(x_ref, w_ref, b_ref, o_ref):
    # x_ref: (C, tn) f32 | w_ref: (E, C) bf16 | b_ref: (E, 1) f32 | o_ref: (E, tn)
    x = x_ref[...].astype(w_ref.dtype)          # VPU cast, no extra HBM pass
    acc = lax.dot_general(
        w_ref[...], x,
        dimension_numbers=(((1,), (0,)), ((), ())),
        preferred_element_type=jnp.float32,
    )                                            # (E, tn), tokens lane-dense
    o_ref[...] = (acc + b_ref[...]).astype(o_ref.dtype)


def _embed_tokens_kernel(x_ref, w_ref, b_ref, o_ref):
    # x_ref: (C, tn) f32 | w_ref: (E, C) bf16 | b_ref: (1, E) f32 | o_ref: (tn, E)
    x = x_ref[...].astype(w_ref.dtype)
    acc = lax.dot_general(
        x, w_ref[...],
        dimension_numbers=(((0,), (1,)), ((), ())),
        preferred_element_type=jnp.float32,
    )                                            # (tn, E), E lane-dense
    o_ref[...] = (acc + b_ref[...]).astype(o_ref.dtype)


# -----------------------------------------------------------------------------
# Wrappers
# -----------------------------------------------------------------------------

def _cost(B, C, N, E, out_dtype):
    out_bytes = B * E * N * np.dtype(out_dtype).itemsize
    in_bytes = B * C * N * 4 + E * C * 2 + E * 4
    return pl.CostEstimate(flops=2 * B * N * E * C, transcendentals=0,
                           bytes_accessed=in_bytes + out_bytes)


def mcfnet_mlp_embed(x, weight, bias, *, tn=1024, out_dtype=jnp.bfloat16):
    """Fused `MLP.forward` + `.permute(0,2,1).reshape(B,E,H,W)` (DecoderHead form).

    x:      (B, C, H, W)  NCHW, as in PyTorch
    weight: (E, C)        torch nn.Linear layout (out_features, in_features)
    bias:   (E,)
    returns (B, E, H, W)
    """
    B, C, H, W = x.shape
    E = weight.shape[0]
    N = H * W
    tn = _choose_tn(tn, N, B)

    x3 = x.reshape(B, C, N)                      # free row-major reshape, f32
    w = weight.astype(jnp.bfloat16)
    b2 = bias.reshape(E, 1).astype(jnp.float32)

    grid = (B, pl.cdiv(N, tn))

    out = pl.pallas_call(
        _embed_nchw_kernel,
        out_shape=jax.ShapeDtypeStruct((B, E, N), out_dtype),
        grid_spec=pltpu.PrefetchScalarGridSpec(
            num_scalar_prefetch=0,
            grid=grid,
            in_specs=[
                # x: (B, C, N) -> kernel sees (C, tn); tokens on lanes.
                pl.BlockSpec((None, C, tn), lambda b, j: (b, 0, j)),
                # weight / bias: constant blocks, VMEM-resident across the grid.
                pl.BlockSpec((E, C), lambda b, j: (0, 0)),
                pl.BlockSpec((E, 1), lambda b, j: (0, 0)),
            ],
            out_specs=pl.BlockSpec((None, E, tn), lambda b, j: (b, 0, j)),
        ),
        compiler_params=pltpu.CompilerParams(
            dimension_semantics=("parallel", "parallel"),
        ),
        cost_estimate=_cost(B, C, N, E, out_dtype),
    )(x3, w, b2)

    return out.reshape(B, E, H, W)


def mcfnet_mlp_tokens(x, weight, bias, *, tn=1024, out_dtype=jnp.bfloat16):
    """Exact parity with PyTorch MLP.forward, emitted in-kernel: (B, H*W, E)."""
    B, C, H, W = x.shape
    E = weight.shape[0]
    N = H * W
    tn = _choose_tn(tn, N, B)

    x3 = x.reshape(B, C, N)
    w = weight.astype(jnp.bfloat16)
    b2 = bias.reshape(1, E).astype(jnp.float32)

    grid = (B, pl.cdiv(N, tn))

    out = pl.pallas_call(
        _embed_tokens_kernel,
        out_shape=jax.ShapeDtypeStruct((B, N, E), out_dtype),
        grid_spec=pltpu.PrefetchScalarGridSpec(
            num_scalar_prefetch=0,
            grid=grid,
            in_specs=[
                pl.BlockSpec((None, C, tn), lambda b, j: (b, 0, j)),
                pl.BlockSpec((E, C), lambda b, j: (0, 0)),
                pl.BlockSpec((1, E), lambda b, j: (0, 0)),
            ],
            out_specs=pl.BlockSpec((None, tn, E), lambda b, j: (b, j, 0)),
        ),
        compiler_params=pltpu.CompilerParams(
            dimension_semantics=("parallel", "parallel"),
        ),
        cost_estimate=_cost(B, C, N, E, out_dtype),
    )(x3, w, b2)

    return out


def mlp_forward(x, weight, bias, **kwargs):
    """PyTorch MLP.forward contract: (B, H*W, E), produced directly in-kernel."""
    return mcfnet_mlp_tokens(x, weight, bias, **kwargs)


if __name__ == "__main__":
    # Small shapes consistent with the module: input_dim=C=32, embed_dim=E=256
    # (real MCFNet uses embed_dim=768; 256 keeps the demo small but lane-dense).
    B, C, H, W = 2, 32, 16, 16
    E = 256

    key = jax.random.PRNGKey(0)
    kx, kw, kb = jax.random.split(key, 3)

    x = jax.random.normal(kx, (B, C, H, W), dtype=jnp.float32)
    weight = jax.random.normal(kw, (E, C), dtype=jnp.float32) * (1.0 / (C ** 0.5))
    bias = jax.random.normal(kb, (E,), dtype=jnp.float32) * 0.01

    # Reference: same math as torch (flatten(2).transpose(1,2) @ W.T + b), with
    # operands rounded to bf16 to match the kernel's compute dtype.
    xb = x.astype(jnp.bfloat16).astype(jnp.float32)
    wb = weight.astype(jnp.bfloat16).astype(jnp.float32)
    y_ref_tok = jnp.transpose(xb.reshape(B, C, H * W), (0, 2, 1)) @ wb.T + bias

    # 1) NCHW-form output (DecoderHead form), f32 epilogue for a tight check.
    y_nchw_f32 = mcfnet_mlp_embed(x, weight, bias, out_dtype=jnp.float32)
    jax.block_until_ready(y_nchw_f32)
    assert y_nchw_f32.shape == (B, E, H, W)
    got = jnp.transpose(y_nchw_f32.reshape(B, E, H * W), (0, 2, 1))
    assert jnp.allclose(got, y_ref_tok, atol=1e-3, rtol=1e-3)

    # 2) Default bf16-writeback path (the production configuration).
    y_nchw = mcfnet_mlp_embed(x, weight, bias)
    jax.block_until_ready(y_nchw)
    assert y_nchw.dtype == jnp.bfloat16
    got = jnp.transpose(y_nchw.astype(jnp.float32).reshape(B, E, H * W), (0, 2, 1))
    assert jnp.allclose(got, y_ref_tok, atol=3e-2, rtol=3e-2)

    # 3) Token-major output produced in-kernel (MLP.forward parity, no
    #    post-hoc transpose pass over HBM).
    y_tok = mlp_forward(x, weight, bias, out_dtype=jnp.float32)
    jax.block_until_ready(y_tok)
    assert y_tok.shape == (B, H * W, E)
    assert jnp.allclose(y_tok, y_ref_tok, atol=1e-3, rtol=1e-3)

    # 4) Ragged N (masked tail tile) with B=1: N = 144 -> one full 128-token
    #    tile + one partial; also exercises the >=2-grid-step megacore path.
    B2, H2, W2 = 1, 12, 12
    x2 = jax.random.normal(jax.random.PRNGKey(1), (B2, C, H2, W2), dtype=jnp.float32)
    y2 = mlp_forward(x2, weight, bias, tn=128, out_dtype=jnp.float32)
    jax.block_until_ready(y2)
    x2b = x2.astype(jnp.bfloat16).astype(jnp.float32)
    y2_ref = jnp.transpose(x2b.reshape(B2, C, H2 * W2), (0, 2, 1)) @ wb.T + bias
    assert y2.shape == (B2, H2 * W2, E)
    assert jnp.allclose(y2, y2_ref, atol=1e-3, rtol=1e-3)

    # 5) Tiny N (< 128): the token tile equals the full extent (no padded block).
    B3, H3, W3 = 1, 8, 8
    x3s = jax.random.normal(jax.random.PRNGKey(2), (B3, C, H3, W3), dtype=jnp.float32)
    y3 = mcfnet_mlp_embed(x3s, weight, bias, out_dtype=jnp.float32)
    jax.block_until_ready(y3)
    x3b = x3s.astype(jnp.bfloat16).astype(jnp.float32)
    y3_ref = jnp.transpose(x3b.reshape(B3, C, H3 * W3), (0, 2, 1)) @ wb.T + bias
    assert jnp.allclose(
        jnp.transpose(y3.reshape(B3, E, H3 * W3), (0, 2, 1)),
        y3_ref, atol=1e-3, rtol=1e-3)

    print("KERNEL_OK")
</pallas_src>

<mosaic_0001>
module attributes {stable_mosaic.version = 11 : i64} {
  func.func @_embed_nchw_kernel(%arg0: i32, %arg1: i32, %arg2: memref<1x32x256xf32, #tpu.memory_space<vmem>>, %arg3: memref<256x32xbf16, #tpu.memory_space<vmem>>, %arg4: memref<256x1xf32, #tpu.memory_space<vmem>>, %arg5: memref<1x256x256xf32, #tpu.memory_space<vmem>>) attributes {dimension_semantics = [#tpu.dimension_semantics<parallel>, #tpu.dimension_semantics<parallel>], iteration_bounds = array<i64: 2, 1>, scalar_prefetch = 0 : i64, scratch_operands = 0 : i64, tpu.core_type = #tpu.core_type<tc>, window_params = [{transform_indices = @transform_0, window_bounds = array<i64: 1, 32, 256>}, {pipeline_mode = #tpu.pipeline_mode<synchronous>, transform_indices = @transform_1, window_bounds = array<i64: 256, 32>}, {pipeline_mode = #tpu.pipeline_mode<synchronous>, transform_indices = @transform_2, window_bounds = array<i64: 256, 1>}, {transform_indices = @transform_3, window_bounds = array<i64: 1, 256, 256>}]} {
    %c0 = arith.constant 0 : index
    %c0_0 = arith.constant 0 : index
    %c0_1 = arith.constant 0 : index
    %0 = vector.load %arg2[%c0, %c0_0, %c0_1] : memref<1x32x256xf32, #tpu.memory_space<vmem>>, vector<1x32x256xf32>
    %1 = vector.shape_cast %0 : vector<1x32x256xf32> to vector<32x256xf32>
    %2 = arith.truncf %1 : vector<32x256xf32> to vector<32x256xbf16>
    %c0_2 = arith.constant 0 : index
    %c0_3 = arith.constant 0 : index
    %3 = vector.load %arg3[%c0_2, %c0_3] : memref<256x32xbf16, #tpu.memory_space<vmem>>, vector<256x32xbf16>
    %cst = arith.constant dense<0.000000e+00> : vector<256x256xf32>
    %4 = tpu.matmul %3, %2, %cst {dimension_numbers = #tpu.dot_dimension_numbers<[1], [0], [0], [1], [0, 0, 1, 1], [], []>} : vector<256x32xbf16>, vector<32x256xbf16>, vector<256x256xf32> -> vector<256x256xf32>
    %c0_4 = arith.constant 0 : index
    %c0_5 = arith.constant 0 : index
    %5 = vector.load %arg4[%c0_4, %c0_5] : memref<256x1xf32, #tpu.memory_space<vmem>>, vector<256x1xf32>
    %6 = vector.broadcast %5 : vector<256x1xf32> to vector<256x256xf32>
    %7 = arith.addf %4, %6 : vector<256x256xf32>
    %c0_6 = arith.constant 0 : index
    %c0_7 = arith.constant 0 : index
    %c0_8 = arith.constant 0 : index
    %8 = vector.load %arg5[%c0_6, %c0_7, %c0_8] : memref<1x256x256xf32, #tpu.memory_space<vmem>>, vector<1x256x256xf32>
    %9 = vector.shape_cast %8 : vector<1x256x256xf32> to vector<256x256xf32>
    %10 = vector.shape_cast %7 : vector<256x256xf32> to vector<1x256x256xf32>
    tpu.vector_store %arg5[%c0_6, %c0_7, %c0_8], %10 {strides = array<i32>} : memref<1x256x256xf32, #tpu.memory_space<vmem>>, vector<1x256x256xf32>,
    return
  }
  func.func @transform_0(%arg0: i32, %arg1: i32) -> (i32, i32, i32) {
    %c0_i32 = arith.constant 0 : i32
    %c0_i32_0 = arith.constant 0 : i32
    return %arg0, %c0_i32, %arg1 : i32, i32, i32
  }
  func.func @transform_1(%arg0: i32, %arg1: i32) -> (i32, i32) {
    %c0_i32 = arith.constant 0 : i32
    %c0_i32_0 = arith.constant 0 : i32
    %c0_i32_1 = arith.constant 0 : i32
    return %c0_i32, %c0_i32_0 : i32, i32
  }
  func.func @transform_2(%arg0: i32, %arg1: i32) -> (i32, i32) {
    %c0_i32 = arith.constant 0 : i32
    %c0_i32_0 = arith.constant 0 : i32
    %c0_i32_1 = arith.constant 0 : i32
    return %c0_i32, %c0_i32_0 : i32, i32
  }
  func.func @transform_3(%arg0: i32, %arg1: i32) -> (i32, i32, i32) {
    %c0_i32 = arith.constant 0 : i32
    %c0_i32_0 = arith.constant 0 : i32
    return %arg0, %c0_i32, %arg1 : i32, i32, i32
  }
}

</mosaic_0001>

<llo_original>
// kernel: tpu_custom_call.1
$region0: #{tpu_custom_call.1}
  #allocation0 [shape = 'u32[]', space=smem, size = 0x4, offset = 0x4, fixed_abs, tag = 'smem constant byte address 0x4 - core index']
  #allocation1 [shape = 'u32[144,128]{1,0:T(1,128)}', space=vmem, size = 0x12000, scoped, tag = 'internal scratch']
  %s0 = inlined_call_operand.vmem [shape: f32[2,32,256], index: 0, kind: input, shape index: {}]
  %s1 = inlined_call_operand.vmem [shape: bf16[256,32], index: 1, kind: input, shape index: {}]
  %s2 = inlined_call_operand.vmem [shape: f32[256,1], index: 2, kind: input, shape index: {}]
  %s3 = inlined_call_operand.hbm [shape: f32[2,256,256], index: 3, kind: output, shape index: {}]
  %s4 = sld [smem:[#allocation0]]
  $region45: #{tpu_custom_call.1} parent=0
    _
  %s6 = ssub.s32 1, %s4
  %s7 = scalar_select 0, %s6, %s4
  $region1: #{tpu_custom_call.1} parent=0
    #allocation2 [shape = 'u8[524288]{0}', space=vmem, size = 0x80000, scoped, tag = 'output window, operand 0']
    #allocation3 [shape = 's32[2]{0}', space=sflag, size = 0x8, scoped, tag = 'scoped memory for tpu_custom_call.1']
    %8 = vsyncpa [#allocation3], 0
    %s9 = scalar_lea.sflag [#allocation3], 1
    %10 = vsyncpa %s9, 0
    loop: start=0, step=1, limit=4
    $region2: #{tpu_custom_call.1} parent=1 // loop_pre_header
      _
    $region3: #{tpu_custom_call.1} parent=1 // loop_header
      %s12 = sphi 0, %s16
      %p13 = scmp.ge.s32.totalorder %s12, 4
      %s19 = sphi 0, %s31
      %s20 = sphi 0, %s27
      %s21 = sphi 0, %s19
      %s22 = sphi 0, %s20
      %s23 = sphi 0, %s21
      %s24 = sphi 0, %s22
      %s36 = sphi 0, %s38
      %s39 = sphi 0, %s36
      %s40 = sphi 0, %s39
      %s56 = sphi 0, %s40
      %s60 = sphi 0, %s60
      %s62 = sphi 0, %s60
      %s63 = sphi 0, %s62
      %s77 = sphi 0, %s63
      %s81 = sphi 0, %s81
      %s83 = sphi 0, %s81
      %s84 = sphi 0, %s83
      %s98 = sphi 0, %s84
      %s106 = sphi 0, %s108
      %s109 = sphi 0, %s106
      %s110 = sphi 0, %s109
      %s126 = sphi 0, %s110
    $region4: #{tpu_custom_call.1} parent=1 // loop_header_branch
      %15 = sbr.rel (%p13) target = $region8
    $region5: #{tpu_custom_call.1} parent=1 // loop_body
      %s17 = ssub.s32 %s12, 1
      %s18 = ssub.s32 %s12, 2
      %s25 = sadd.s32 1, %s20
      %p26 = scmp.ge.s32.totalorder %s25, 1
      %s27 = scalar_select %p26, 0, %s25
      %s28 = sadd.s32 1, %s19
      %s29 = scalar_select %p26, %s28, %s19
      %p30 = scmp.ge.s32.totalorder %s29, 2
      %s31 = scalar_select %p30, 0, %s29
      %s32 = ssub.s32 %s19, %s31
      %s33 = ssub.s32 %s20, %s27
      %s34 = sor.u32 %s32, %s33
      %p35 = scmp.eq.s32.totalorder %s34, 0
      %s37 = sadd.s32 %s36, 1
      %s38 = scalar_select %p35, %s36, %s37
      %p41 = pneg %p35
      %p42 = scmp.eq.s32.totalorder %s12, 1
      %p43 = por %p41, %p42
      %p44 = scmp.ne.s32.totalorder %s36, %s39
      %p45 = scmp.eq.s32.totalorder %s12, 0
      %p46 = por %p44, %p45
      %p47 = scmp.ne.s32.totalorder %s36, %s39
      %p48 = scmp.eq.s32.totalorder %s17, 1
      %p49 = por %p47, %p48
      %p50 = scmp.ne.s32.totalorder %s39, %s40
      %p51 = scmp.eq.s32.totalorder %s17, 0
      %p52 = por %p50, %p51
      %p53 = scmp.ne.s32.totalorder %s39, %s40
      %p54 = scmp.eq.s32.totalorder %s18, 1
      %p55 = por %p53, %p54
      %p57 = scmp.ne.s32.totalorder %s40, %s56
      %p58 = scmp.eq.s32.totalorder %s18, 0
      %p59 = por %p57, %p58
      %s61 = sadd.s32 %s60, 1
      %p64 = scmp.eq.s32.totalorder %s12, 1
      %p65 = scmp.ne.s32.totalorder %s60, %s62
      %p66 = scmp.eq.s32.totalorder %s12, 0
      %p67 = por %p65, %p66
      %p68 = scmp.ne.s32.totalorder %s60, %s62
      %p69 = scmp.eq.s32.totalorder %s17, 1
      %p70 = por %p68, %p69
      %p71 = scmp.ne.s32.totalorder %s62, %s63
      %p72 = scmp.eq.s32.totalorder %s17, 0
      %p73 = por %p71, %p72
      %p74 = scmp.ne.s32.totalorder %s62, %s63
      %p75 = scmp.eq.s32.totalorder %s18, 1
      %p76 = por %p74, %p75
      %p78 = scmp.ne.s32.totalorder %s63, %s77
      %p79 = scmp.eq.s32.totalorder %s18, 0
      %p80 = por %p78, %p79
      %s82 = sadd.s32 %s81, 1
      %p85 = scmp.eq.s32.totalorder %s12, 1
      %p86 = scmp.ne.s32.totalorder %s81, %s83
      %p87 = scmp.eq.s32.totalorder %s12, 0
      %p88 = por %p86, %p87
      %p89 = scmp.ne.s32.totalorder %s81, %s83
      %p90 = scmp.eq.s32.totalorder %s17, 1
      %p91 = por %p89, %p90
      %p92 = scmp.ne.s32.totalorder %s83, %s84
      %p93 = scmp.eq.s32.totalorder %s17, 0
      %p94 = por %p92, %p93
      %p95 = scmp.ne.s32.totalorder %s83, %s84
      %p96 = scmp.eq.s32.totalorder %s18, 1
      %p97 = por %p95, %p96
      %p99 = scmp.ne.s32.totalorder %s84, %s98
      %p100 = scmp.eq.s32.totalorder %s18, 0
      %p101 = por %p99, %p100
      %s102 = ssub.s32 %s19, %s31
      %s103 = ssub.s32 %s20, %s27
      %s104 = sor.u32 %s102, %s103
      %p105 = scmp.eq.s32.totalorder %s104, 0
      %s107 = sadd.s32 %s106, 1
      %s108 = scalar_select %p105, %s106, %s107
      %p111 = pneg %p105
      %p112 = scmp.eq.s32.totalorder %s12, 1
      %p113 = por %p111, %p112
      %p114 = scmp.ne.s32.totalorder %s106, %s109
      %p115 = scmp.eq.s32.totalorder %s12, 0
      %p116 = por %p114, %p115
      %p117 = scmp.ne.s32.totalorder %s106, %s109
      %p118 = scmp.eq.s32.totalorder %s17, 1
      %p119 = por %p117, %p118
      %p120 = scmp.ne.s32.totalorder %s109, %s110
      %p121 = scmp.eq.s32.totalorder %s17, 0
      %p122 = por %p120, %p121
      %p123 = scmp.ne.s32.totalorder %s109, %s110
      %p124 = scmp.eq.s32.totalorder %s18, 1
      %p125 = por %p123, %p124
      %p127 = scmp.ne.s32.totalorder %s110, %s126
      %p128 = scmp.eq.s32.totalorder %s18, 0
      %p129 = por %p127, %p128
      %p130 = scmp.le.s32.totalorder 1, %s12
      %p131 = scmp.lt.s32.totalorder %s12, 3
      %p132 = pnand %p130, %p131
      %p133 = pneg %p132
      // Predicated region
      $region9: #{tpu_custom_call.1} parent=5 // pred_check
        _
      $region10: #{tpu_custom_call.1} parent=5 // pred_check_branch
        %135 = sbr.rel (%p132) target = $region12
      $region11: #{tpu_custom_call.1} parent=5 // pred_region
        %s136 = ssub.s32 %s12, 1
        // Predicated region
        $region13: #{tpu_custom_call.1} parent=11 // pred_check
          %p137 = pneg %p73
        $region14: #{tpu_custom_call.1} parent=11 // pred_check_branch
          %139 = sbr.rel (%p137) target = $region16
        $region15: #{tpu_custom_call.1} parent=11 // pred_region
          _
        $region16: #{tpu_custom_call.1} parent=11 // pred_fallthru
          _
        // Predicated region
        $region17: #{tpu_custom_call.1} parent=11 // pred_check
          %p140 = pneg %p94
        $region18: #{tpu_custom_call.1} parent=11 // pred_check_branch
          %142 = sbr.rel (%p140) target = $region20
        $region19: #{tpu_custom_call.1} parent=11 // pred_region
          _
        $region20: #{tpu_custom_call.1} parent=11 // pred_fallthru
          _
      $region12: #{tpu_custom_call.1} parent=5 // pred_fallthru
        _
      %p143 = scmp.lt.s32.totalorder %s12, 2
      // Predicated region
      $region21: #{tpu_custom_call.1} parent=5 // pred_check
        %p144 = pneg %p143
      $region22: #{tpu_custom_call.1} parent=5 // pred_check_branch
        %146 = sbr.rel (%p144) target = $region24
      $region23: #{tpu_custom_call.1} parent=5 // pred_region
        // Predicated region
        $region25: #{tpu_custom_call.1} parent=23 // pred_check
          %p147 = pneg %p46
        $region26: #{tpu_custom_call.1} parent=23 // pred_check_branch
          %149 = sbr.rel (%p147) target = $region28
        $region27: #{tpu_custom_call.1} parent=23 // pred_region
          %s150 = smul.u32 2, %s20
          %p151 = scmp.lt.s32.totalorder %s19, 1
          %s152 = scalar_select %p151, %s19, 1
          %p153 = scmp.lt.s32.totalorder %s150, 1
          %s154 = scalar_select %p153, %s150, 1
          %s155 = smul.addr %s152, 8
          %s156 = sadd.s32 %s154, %s155
          %s157 = smul.addr %s156, 8
          %s158 = scalar_lea.vmem %s0, %s157
          %s159 = smul.u32 2, %s20
        $region28: #{tpu_custom_call.1} parent=23 // pred_fallthru
          _
      $region24: #{tpu_custom_call.1} parent=5 // pred_fallthru
        _
      %p160 = scmp.le.s32.totalorder 1, %s12
      %p161 = scmp.lt.s32.totalorder %s12, 3
      %p162 = pnand %p160, %p161
      %p163 = pneg %p162
      // Predicated region
      $region29: #{tpu_custom_call.1} parent=5 // pred_check
        _
      $region30: #{tpu_custom_call.1} parent=5 // pred_check_branch
        %165 = sbr.rel (%p162) target = $region32
      $region31: #{tpu_custom_call.1} parent=5 // pred_region
        %s166 = ssub.s32 %s12, 1
        %s167 = smul.u32 2, %s22
        %p168 = scmp.lt.s32.totalorder %s21, 1
        %s169 = scalar_select %p168, %s21, 1
        %p170 = scmp.lt.s32.totalorder %s167, 1
        %s171 = scalar_select %p170, %s167, 1
        %s172 = smul.addr %s169, 8
        %s173 = sadd.s32 %s171, %s172
        %s174 = smul.addr %s173, 8
        %s175 = scalar_lea.vmem %s0, %s174
        %p176 = pneg %p52
        %p177 = pneg %p49
        %p178 = pneg %p73
        %p179 = pneg %p70
        %p180 = pneg %p94
        %p181 = pneg %p91
        %p182 = pneg %p122
        %p183 = pneg %p119
        %s184 = sand.u32 %s109, 1
        %s185 = scalar_lea.sflag [#allocation3], %s184
        %s186 = sand.u32 %s109, 1
        %s187 = smul.addr %s186, 512
        %s188 = scalar_lea.vmem [#allocation2], %s187
        %s189 = smul.u32 2, %s22
        %p190 = scmp.lt.s32.totalorder %s21, 1
        %s191 = scalar_select %p190, %s21, 1
        %p192 = scmp.lt.s32.totalorder %s189, 1
        %s193 = scalar_select %p192, %s189, 1
        %s194 = smul.addr %s191, 8
        %s195 = sadd.s32 %s193, %s194
        %s196 = smul.addr %s195, 8
        %s197 = scalar_lea.vmem %s0, %s196
        %s198 = smul.u32 2, %s22
        %s199 = smul.u32 2, %s22
        %v201 = vld [vmem:[%s197] sm:$0xff]
        %v202 = vld [vmem:[%s197 + $0x8] sm:$0xff]
        %v203 = vld [vmem:[%s197 + $0x10] sm:$0xff]
        %v204 = vld [vmem:[%s197 + $0x18] sm:$0xff]
        %v205 = vld [vmem:[%s197 + $0x20] sm:$0xff]
        %v206 = vld [vmem:[%s197 + $0x28] sm:$0xff]
        %v207 = vld [vmem:[%s197 + $0x30] sm:$0xff]
        %v208 = vld [vmem:[%s197 + $0x38] sm:$0xff]
        %v209 = vpack.c.bf16 %v203, %v201
        %v210 = vpack.c.bf16 %v204, %v202
        %v211 = vpack.c.bf16 %v207, %v205
        %v212 = vpack.c.bf16 %v208, %v206
        %v213 = vld [vmem:[%s1] sm:$0xf]
        %v214 = vld [vmem:[%s1 + $0x4] sm:$0xf]
        %v215 = vld [vmem:[%s1 + $0x8] sm:$0xf]
        %v216 = vld [vmem:[%s1 + $0xc] sm:$0xf]
        %v217 = vld [vmem:[%s1 + $0x10] sm:$0xf]
        %v218 = vld [vmem:[%s1 + $0x14] sm:$0xf]
        %v219 = vld [vmem:[%s1 + $0x18] sm:$0xf]
        %v220 = vld [vmem:[%s1 + $0x1c] sm:$0xf]
        %v221 = vld [vmem:[%s1 + $0x20] sm:$0xf]
        %v222 = vld [vmem:[%s1 + $0x24] sm:$0xf]
        %v223 = vld [vmem:[%s1 + $0x28] sm:$0xf]
        %v224 = vld [vmem:[%s1 + $0x2c] sm:$0xf]
        %v225 = vld [vmem:[%s1 + $0x30] sm:$0xf]
        %v226 = vld [vmem:[%s1 + $0x34] sm:$0xf]
        %v227 = vld [vmem:[%s1 + $0x38] sm:$0xf]
        %v228 = vld [vmem:[%s1 + $0x3c] sm:$0xf]
        %v229 = vld [vmem:[%s1 + $0x40] sm:$0xf]
        %v230 = vld [vmem:[%s1 + $0x44] sm:$0xf]
        %v231 = vld [vmem:[%s1 + $0x48] sm:$0xf]
        %v232 = vld [vmem:[%s1 + $0x4c] sm:$0xf]
        %v233 = vld [vmem:[%s1 + $0x50] sm:$0xf]
        %v234 = vld [vmem:[%s1 + $0x54] sm:$0xf]
        %v235 = vld [vmem:[%s1 + $0x58] sm:$0xf]
        %v236 = vld [vmem:[%s1 + $0x5c] sm:$0xf]
        %v237 = vld [vmem:[%s1 + $0x60] sm:$0xf]
        %v238 = vld [vmem:[%s1 + $0x64] sm:$0xf]
        %v239 = vld [vmem:[%s1 + $0x68] sm:$0xf]
        %v240 = vld [vmem:[%s1 + $0x6c] sm:$0xf]
        %v241 = vld [vmem:[%s1 + $0x70] sm:$0xf]
        %v242 = vld [vmem:[%s1 + $0x74] sm:$0xf]
        %v243 = vld [vmem:[%s1 + $0x78] sm:$0xf]
        %v244 = vld [vmem:[%s1 + $0x7c] sm:$0xf]
        %v245 = vld [vmem:[%s2] sm:$0xff]
        %v246 = vld [vmem:[%s2 + $0x8] sm:$0xff]
        %v247 = vld [vmem:[%s2 + $0x10] sm:$0xff]
        %v248 = vld [vmem:[%s2 + $0x18] sm:$0xff]
        %v249 = vld [vmem:[%s2 + $0x20] sm:$0xff]
        %v250 = vld [vmem:[%s2 + $0x28] sm:$0xff]
        %v251 = vld [vmem:[%s2 + $0x30] sm:$0xff]
        %v252 = vld [vmem:[%s2 + $0x38] sm:$0xff]
        %v253 = vld [vmem:[%s2 + $0x40] sm:$0xff]
        %v254 = vld [vmem:[%s2 + $0x48] sm:$0xff]
        %v255 = vld [vmem:[%s2 + $0x50] sm:$0xff]
        %v256 = vld [vmem:[%s2 + $0x58] sm:$0xff]
        %v257 = vld [vmem:[%s2 + $0x60] sm:$0xff]
        %v258 = vld [vmem:[%s2 + $0x68] sm:$0xff]
        %v259 = vld [vmem:[%s2 + $0x70] sm:$0xff]
        %v260 = vld [vmem:[%s2 + $0x78] sm:$0xff]
        %v261 = vld [vmem:[%s2 + $0x80] sm:$0xff]
        %v262 = vld [vmem:[%s2 + $0x88] sm:$0xff]
        %v263 = vld [vmem:[%s2 + $0x90] sm:$0xff]
        %v264 = vld [vmem:[%s2 + $0x98] sm:$0xff]
        %v265 = vld [vmem:[%s2 + $0xa0] sm:$0xff]
        %v266 = vld [vmem:[%s2 + $0xa8] sm:$0xff]
        %v267 = vld [vmem:[%s2 + $0xb0] sm:$0xff]
        %v268 = vld [vmem:[%s2 + $0xb8] sm:$0xff]
        %v269 = vld [vmem:[%s2 + $0xc0] sm:$0xff]
        %v270 = vld [vmem:[%s2 + $0xc8] sm:$0xff]
        %v271 = vld [vmem:[%s2 + $0xd0] sm:$0xff]
        %v272 = vld [vmem:[%s2 + $0xd8] sm:$0xff]
        %v273 = vld [vmem:[%s2 + $0xe0] sm:$0xff]
        %v274 = vld [vmem:[%s2 + $0xe8] sm:$0xff]
        %v275 = vld [vmem:[%s2 + $0xf0] sm:$0xff]
        %v276 = vld [vmem:[%s2 + $0xf8] sm:$0xff]
        %278 = vset.pattern.permute.xlu0 0
        %279 = vperm.xlu0 %278, %v245
        %v280 = vpop.permute.xlu0 %279
        %283 = vset.pattern.permute.xlu0 0
        %284 = vperm.xlu0 %283, %v246
        %v285 = vpop.permute.xlu0 %284
        %288 = vset.pattern.permute.xlu0 0
        %289 = vperm.xlu0 %288, %v247
        %v290 = vpop.permute.xlu0 %289
        %293 = vset.pattern.permute.xlu0 0
        %294 = vperm.xlu0 %293, %v248
        %v295 = vpop.permute.xlu0 %294
        %298 = vset.pattern.permute.xlu0 0
        %299 = vperm.xlu0 %298, %v249
        %v300 = vpop.permute.xlu0 %299
        %303 = vset.pattern.permute.xlu0 0
        %304 = vperm.xlu0 %303, %v250
        %v305 = vpop.permute.xlu0 %304
        %308 = vset.pattern.permute.xlu0 0
        %309 = vperm.xlu0 %308, %v251
        %v310 = vpop.permute.xlu0 %309
        %313 = vset.pattern.permute.xlu0 0
        %314 = vperm.xlu0 %313, %v252
        %v315 = vpop.permute.xlu0 %314
        %318 = vset.pattern.permute.xlu0 0
        %319 = vperm.xlu0 %318, %v253
        %v320 = vpop.permute.xlu0 %319
        %323 = vset.pattern.permute.xlu0 0
        %324 = vperm.xlu0 %323, %v254
        %v325 = vpop.permute.xlu0 %324
        %328 = vset.pattern.permute.xlu0 0
        %329 = vperm.xlu0 %328, %v255
        %v330 = vpop.permute.xlu0 %329
        %333 = vset.pattern.permute.xlu0 0
        %334 = vperm.xlu0 %333, %v256
        %v335 = vpop.permute.xlu0 %334
        %338 = vset.pattern.permute.xlu0 0
        %339 = vperm.xlu0 %338, %v257
        %v340 = vpop.permute.xlu0 %339
        %343 = vset.pattern.permute.xlu0 0
        %344 = vperm.xlu0 %343, %v258
        %v345 = vpop.permute.xlu0 %344
        %348 = vset.pattern.permute.xlu0 0
        %349 = vperm.xlu0 %348, %v259
        %v350 = vpop.permute.xlu0 %349
        %353 = vset.pattern.permute.xlu0 0
        %354 = vperm.xlu0 %353, %v260
        %v355 = vpop.permute.xlu0 %354
        %358 = vset.pattern.permute.xlu0 0
        %359 = vperm.xlu0 %358, %v261
        %v360 = vpop.permute.xlu0 %359
        %363 = vset.pattern.permute.xlu0 0
        %364 = vperm.xlu0 %363, %v262
        %v365 = vpop.permute.xlu0 %364
        %368 = vset.pattern.permute.xlu0 0
        %369 = vperm.xlu0 %368, %v263
        %v370 = vpop.permute.xlu0 %369
        %373 = vset.pattern.permute.xlu0 0
        %374 = vperm.xlu0 %373, %v264
        %v375 = vpop.permute.xlu0 %374
        %378 = vset.pattern.permute.xlu0 0
        %379 = vperm.xlu0 %378, %v265
        %v380 = vpop.permute.xlu0 %379
        %383 = vset.pattern.permute.xlu0 0
        %384 = vperm.xlu0 %383, %v266
        %v385 = vpop.permute.xlu0 %384
        %388 = vset.pattern.permute.xlu0 0
        %389 = vperm.xlu0 %388, %v267
        %v390 = vpop.permute.xlu0 %389
        %393 = vset.pattern.permute.xlu0 0
        %394 = vperm.xlu0 %393, %v268
        %v395 = vpop.permute.xlu0 %394
        %398 = vset.pattern.permute.xlu0 0
        %399 = vperm.xlu0 %398, %v269
        %v400 = vpop.permute.xlu0 %399
        %403 = vset.pattern.permute.xlu0 0
        %404 = vperm.xlu0 %403, %v270
        %v405 = vpop.permute.xlu0 %404
        %408 = vset.pattern.permute.xlu0 0
        %409 = vperm.xlu0 %408, %v271
        %v410 = vpop.permute.xlu0 %409
        %413 = vset.pattern.permute.xlu0 0
        %414 = vperm.xlu0 %413, %v272
        %v415 = vpop.permute.xlu0 %414
        %418 = vset.pattern.permute.xlu0 0
        %419 = vperm.xlu0 %418, %v273
        %v420 = vpop.permute.xlu0 %419
        %423 = vset.pattern.permute.xlu0 0
        %424 = vperm.xlu0 %423, %v274
        %v425 = vpop.permute.xlu0 %424
        %428 = vset.pattern.permute.xlu0 0
        %429 = vperm.xlu0 %428, %v275
        %v430 = vpop.permute.xlu0 %429
        %433 = vset.pattern.permute.xlu0 0
        %434 = vperm.xlu0 %433, %v276
        %v435 = vpop.permute.xlu0 %434
        %v469 = vunpack.c.l.b16 %v213
        %v470 = vunpack.c.l.b16 %v214
        %v471 = vunpack.c.l.b16 %v215
        %v472 = vunpack.c.l.b16 %v216
        %v473 = vunpack.c.l.b16 %v217
        %v474 = vunpack.c.l.b16 %v218
        %v475 = vunpack.c.l.b16 %v219
        %v476 = vunpack.c.l.b16 %v220
        %v477 = vunpack.c.l.b16 %v221
        %v478 = vunpack.c.l.b16 %v222
        %v479 = vunpack.c.l.b16 %v223
        %v480 = vunpack.c.l.b16 %v224
        %v481 = vunpack.c.l.b16 %v225
        %v482 = vunpack.c.l.b16 %v226
        %v483 = vunpack.c.l.b16 %v227
        %v484 = vunpack.c.l.b16 %v228
        %v485 = vunpack.c.l.b16 %v229
        %v486 = vunpack.c.l.b16 %v230
        %v487 = vunpack.c.l.b16 %v231
        %v488 = vunpack.c.l.b16 %v232
        %v489 = vunpack.c.l.b16 %v233
        %v490 = vunpack.c.l.b16 %v234
        %v491 = vunpack.c.l.b16 %v235
        %v492 = vunpack.c.l.b16 %v236
        %v493 = vunpack.c.l.b16 %v237
        %v494 = vunpack.c.l.b16 %v238
        %v495 = vunpack.c.l.b16 %v239
        %v496 = vunpack.c.l.b16 %v240
        %v497 = vunpack.c.l.b16 %v241
        %v498 = vunpack.c.l.b16 %v242
        %v499 = vunpack.c.l.b16 %v243
        %v500 = vunpack.c.l.b16 %v244
        %v501 = vpack.c.b16 %v470, %v469
        %v502 = vpack.c.b16 %v472, %v471
        %v503 = vpack.c.b16 %v474, %v473
        %v504 = vpack.c.b16 %v476, %v475
        %v505 = vpack.c.b16 %v478, %v477
        %v506 = vpack.c.b16 %v480, %v479
        %v507 = vpack.c.b16 %v482, %v481
        %v508 = vpack.c.b16 %v484, %v483
        %v509 = vpack.c.b16 %v486, %v485
        %v510 = vpack.c.b16 %v488, %v487
        %v511 = vpack.c.b16 %v490, %v489
        %v512 = vpack.c.b16 %v492, %v491
        %v513 = vpack.c.b16 %v494, %v493
        %v514 = vpack.c.b16 %v496, %v495
        %v515 = vpack.c.b16 %v498, %v497
        %v516 = vpack.c.b16 %v500, %v499
        %vm517 = vcmask 261120
        %v519 = vsel %vm517, %v501, 0
        %v522 = vsel %vm517, %v502, 0
        %v525 = vsel %vm517, %v503, 0
        %v528 = vsel %vm517, %v504, 0
        %v531 = vsel %vm517, %v505, 0
        %v534 = vsel %vm517, %v506, 0
        %v537 = vsel %vm517, %v507, 0
        %v540 = vsel %vm517, %v508, 0
        %v543 = vsel %vm517, %v509, 0
        %v546 = vsel %vm517, %v510, 0
        %v549 = vsel %vm517, %v511, 0
        %v552 = vsel %vm517, %v512, 0
        %v555 = vsel %vm517, %v513, 0
        %v558 = vsel %vm517, %v514, 0
        %v561 = vsel %vm517, %v515, 0
        %v564 = vsel %vm517, %v516, 0
        %566 = vmatprep.subr.bf16.mxu0 %v210
        %567 = vmatpush1.bf16.msra.mxu0 %v209
        %568 = vmatprep.subr.bf16.mxu0 %v212
        %569 = vmatpush1.bf16.msra.mxu0 %v211
        %570 = vmatprep.subr.bf16.mxu0 0
        %571 = vmatpush1.bf16.msra.mxu0 0
        %572 = vmatprep.subr.bf16.mxu0 0
        %573 = vmatpush1.bf16.msra.mxu0 0
        %574 = vmatprep.subr.bf16.mxu0 0
        %575 = vmatpush1.bf16.msra.mxu0 0
        %576 = vmatprep.subr.bf16.mxu0 0
        %577 = vmatpush1.bf16.msra.mxu0 0
        %578 = vmatprep.subr.bf16.mxu0 0
        %579 = vmatpush1.bf16.msra.mxu0 0
        %580 = vmatprep.subr.bf16.mxu0 0
        %581 = vmatpush1.bf16.msra.mxu0 0
        %582 = vmatprep.subr.bf16.mxu0 0
        %583 = vmatpush1.bf16.msra.mxu0 0
        %584 = vmatprep.subr.bf16.mxu0 0
        %585 = vmatpush1.bf16.msra.mxu0 0
        %586 = vmatprep.subr.bf16.mxu0 0
        %587 = vmatpush1.bf16.msra.mxu0 0
        %588 = vmatprep.subr.bf16.mxu0 0
        %589 = vmatpush1.bf16.msra.mxu0 0
        %590 = vmatprep.subr.bf16.mxu0 0
        %591 = vmatpush1.bf16.msra.mxu0 0
        %592 = vmatprep.subr.bf16.mxu0 0
        %593 = vmatpush1.bf16.msra.mxu0 0
        %594 = vmatprep.subr.bf16.mxu0 0
        %595 = vmatpush1.bf16.msra.mxu0 0
        %596 = vmatprep.subr.bf16.mxu0 0
        %597 = vmatpush1.bf16.msra.mxu0 0
        %598 = vmatprep.mubr.bf16.mxu0 0
        %599 = vmatmul.mubr.bf16.gmra.mrb[0].mxu0 %v519
        %v600 = vpop.f32.mrb[0].mxu0
        %v601 = vadd.f32 %v280, %v600
        %v602 = vpop.f32.mrb[0].mxu0
        %v603 = vadd.f32 %v280, %v602
        %v604 = vpop.f32.mrb[0].mxu0
        %v605 = vadd.f32 %v285, %v604
        %v606 = vpop.f32.mrb[0].mxu0
        %v607 = vadd.f32 %v285, %v606
        %608 = vmatprep.mubr.bf16.mxu0 0
        %609 = vmatmul.mubr.bf16.gmra.mrb[0].mxu0 %v522
        %v610 = vpop.f32.mrb[0].mxu0
        %v611 = vadd.f32 %v290, %v610
        %v612 = vpop.f32.mrb[0].mxu0
        %v613 = vadd.f32 %v290, %v612
        %v614 = vpop.f32.mrb[0].mxu0
        %v615 = vadd.f32 %v295, %v614
        %v616 = vpop.f32.mrb[0].mxu0
        %v617 = vadd.f32 %v295, %v616
        %618 = vmatprep.mubr.bf16.mxu0 0
        %619 = vmatmul.mubr.bf16.gmra.mrb[0].mxu0 %v525
        %v620 = vpop.f32.mrb[0].mxu0
        %v621 = vadd.f32 %v300, %v620
        %v622 = vpop.f32.mrb[0].mxu0
        %v623 = vadd.f32 %v300, %v622
        %v624 = vpop.f32.mrb[0].mxu0
        %v625 = vadd.f32 %v305, %v624
        %v626 = vpop.f32.mrb[0].mxu0
        %v627 = vadd.f32 %v305, %v626
        %628 = vmatprep.mubr.bf16.mxu0 0
        %629 = vmatmul.mubr.bf16.gmra.mrb[0].mxu0 %v528
        %v630 = vpop.f32.mrb[0].mxu0
        %v631 = vadd.f32 %v310, %v630
        %v632 = vpop.f32.mrb[0].mxu0
        %v633 = vadd.f32 %v310, %v632
        %v634 = vpop.f32.mrb[0].mxu0
        %v635 = vadd.f32 %v315, %v634
        %v636 = vpop.f32.mrb[0].mxu0
        %v637 = vadd.f32 %v315, %v636
        %638 = vmatprep.mubr.bf16.mxu0 0
        %639 = vmatmul.mubr.bf16.gmra.mrb[0].mxu0 %v531
        %v640 = vpop.f32.mrb[0].mxu0
        %v641 = vadd.f32 %v320, %v640
        %v642 = vpop.f32.mrb[0].mxu0
        %v643 = vadd.f32 %v320, %v642
        %v644 = vpop.f32.mrb[0].mxu0
        %v645 = vadd.f32 %v325, %v644
        %v646 = vpop.f32.mrb[0].mxu0
        %v647 = vadd.f32 %v325, %v646
        %648 = vmatprep.mubr.bf16.mxu0 0
        %649 = vmatmul.mubr.bf16.gmra.mrb[0].mxu0 %v534
        %v650 = vpop.f32.mrb[0].mxu0
        %v651 = vadd.f32 %v330, %v650
        %v652 = vpop.f32.mrb[0].mxu0
        %v653 = vadd.f32 %v330, %v652
        %v654 = vpop.f32.mrb[0].mxu0
        %v655 = vadd.f32 %v335, %v654
        %v656 = vpop.f32.mrb[0].mxu0
        %v657 = vadd.f32 %v335, %v656
        %658 = vmatprep.mubr.bf16.mxu0 0
        %659 = vmatmul.mubr.bf16.gmra.mrb[0].mxu0 %v537
        %v660 = vpop.f32.mrb[0].mxu0
        %v661 = vadd.f32 %v340, %v660
        %v662 = vpop.f32.mrb[0].mxu0
        %v663 = vadd.f32 %v340, %v662
        %v664 = vpop.f32.mrb[0].mxu0
        %v665 = vadd.f32 %v345, %v664
        %v666 = vpop.f32.mrb[0].mxu0
        %v667 = vadd.f32 %v345, %v666
        %668 = vmatprep.mubr.bf16.mxu0 0
        %669 = vmatmul.mubr.bf16.gmra.mrb[0].mxu0 %v540
        %v670 = vpop.f32.mrb[0].mxu0
        %v671 = vadd.f32 %v350, %v670
        %v672 = vpop.f32.mrb[0].mxu0
        %v673 = vadd.f32 %v350, %v672
        %v674 = vpop.f32.mrb[0].mxu0
        %v675 = vadd.f32 %v355, %v674
        %v676 = vpop.f32.mrb[0].mxu0
        %v677 = vadd.f32 %v355, %v676
        %678 = vmatprep.mubr.bf16.mxu0 0
        %679 = vmatmul.mubr.bf16.gmra.mrb[0].mxu0 %v543
        %v680 = vpop.f32.mrb[0].mxu0
        %v681 = vadd.f32 %v360, %v680
        %v682 = vpop.f32.mrb[0].mxu0
        %v683 = vadd.f32 %v360, %v682
        %v684 = vpop.f32.mrb[0].mxu0
        %v685 = vadd.f32 %v365, %v684
        %v686 = vpop.f32.mrb[0].mxu0
        %v687 = vadd.f32 %v365, %v686
        %688 = vmatprep.mubr.bf16.mxu0 0
        %689 = vmatmul.mubr.bf16.gmra.mrb[0].mxu0 %v546
        %v690 = vpop.f32.mrb[0].mxu0
        %v691 = vadd.f32 %v370, %v690
        %v692 = vpop.f32.mrb[0].mxu0
        %v693 = vadd.f32 %v370, %v692
        %v694 = vpop.f32.mrb[0].mxu0
        %v695 = vadd.f32 %v375, %v694
        %v696 = vpop.f32.mrb[0].mxu0
        %v697 = vadd.f32 %v375, %v696
        %698 = vmatprep.mubr.bf16.mxu0 0
        %699 = vmatmul.mubr.bf16.gmra.mrb[0].mxu0 %v549
        %v700 = vpop.f32.mrb[0].mxu0
        %v701 = vadd.f32 %v380, %v700
        %v702 = vpop.f32.mrb[0].mxu0
        %v703 = vadd.f32 %v380, %v702
        %v704 = vpop.f32.mrb[0].mxu0
        %v705 = vadd.f32 %v385, %v704
        %v706 = vpop.f32.mrb[0].mxu0
        %v707 = vadd.f32 %v385, %v706
        %708 = vmatprep.mubr.bf16.mxu0 0
        %709 = vmatmul.mubr.bf16.gmra.mrb[0].mxu0 %v552
        %v710 = vpop.f32.mrb[0].mxu0
        %v711 = vadd.f32 %v390, %v710
        %v712 = vpop.f32.mrb[0].mxu0
        %v713 = vadd.f32 %v390, %v712
        %v714 = vpop.f32.mrb[0].mxu0
        %v715 = vadd.f32 %v395, %v714
        %v716 = vpop.f32.mrb[0].mxu0
        %v717 = vadd.f32 %v395, %v716
        %718 = vmatprep.mubr.bf16.mxu0 0
        %719 = vmatmul.mubr.bf16.gmra.mrb[0].mxu0 %v555
        %v720 = vpop.f32.mrb[0].mxu0
        %v721 = vadd.f32 %v400, %v720
        %v722 = vpop.f32.mrb[0].mxu0
        %v723 = vadd.f32 %v400, %v722
        %v724 = vpop.f32.mrb[0].mxu0
        %v725 = vadd.f32 %v405, %v724
        %v726 = vpop.f32.mrb[0].mxu0
        %v727 = vadd.f32 %v405, %v726
        %728 = vmatprep.mubr.bf16.mxu0 0
        %729 = vmatmul.mubr.bf16.gmra.mrb[0].mxu0 %v558
        %v730 = vpop.f32.mrb[0].mxu0
        %v731 = vadd.f32 %v410, %v730
        %v732 = vpop.f32.mrb[0].mxu0
        %v733 = vadd.f32 %v410, %v732
        %v734 = vpop.f32.mrb[0].mxu0
        %v735 = vadd.f32 %v415, %v734
        %v736 = vpop.f32.mrb[0].mxu0
        %v737 = vadd.f32 %v415, %v736
        %738 = vmatprep.mubr.bf16.mxu0 0
        %739 = vmatmul.mubr.bf16.gmra.mrb[0].mxu0 %v561
        %v740 = vpop.f32.mrb[0].mxu0
        %v741 = vadd.f32 %v420, %v740
        %v742 = vpop.f32.mrb[0].mxu0
        %v743 = vadd.f32 %v420, %v742
        %v744 = vpop.f32.mrb[0].mxu0
        %v745 = vadd.f32 %v425, %v744
        %v746 = vpop.f32.mrb[0].mxu0
        %v747 = vadd.f32 %v425, %v746
        %748 = vmatprep.mubr.bf16.mxu0 0
        %749 = vmatmul.mubr.bf16.gmra.mrb[0].mxu0 %v564
        %v750 = vpop.f32.mrb[0].mxu0
        %v751 = vadd.f32 %v430, %v750
        %v752 = vpop.f32.mrb[0].mxu0
        %v753 = vadd.f32 %v430, %v752
        %v754 = vpop.f32.mrb[0].mxu0
        %v755 = vadd.f32 %v435, %v754
        %v756 = vpop.f32.mrb[0].mxu0
        %v757 = vadd.f32 %v435, %v756
        %758 = vdwg.mxu0
        %759 = vst [vmem:[%s188] sm:$0xff] %v601
        %760 = vst [vmem:[%s188 + $0x8] sm:$0xff] %v603
        %761 = vst [vmem:[%s188 + $0x10] sm:$0xff] %v605
        %762 = vst [vmem:[%s188 + $0x18] sm:$0xff] %v607
        %763 = vst [vmem:[%s188 + $0x20] sm:$0xff] %v611
        %764 = vst [vmem:[%s188 + $0x28] sm:$0xff] %v613
        %765 = vst [vmem:[%s188 + $0x30] sm:$0xff] %v615
        %766 = vst [vmem:[%s188 + $0x38] sm:$0xff] %v617
        %767 = vst [vmem:[%s188 + $0x40] sm:$0xff] %v621
        %768 = vst [vmem:[%s188 + $0x48] sm:$0xff] %v623
        %769 = vst [vmem:[%s188 + $0x50] sm:$0xff] %v625
        %770 = vst [vmem:[%s188 + $0x58] sm:$0xff] %v627
        %771 = vst [vmem:[%s188 + $0x60] sm:$0xff] %v631
        %772 = vst [vmem:[%s188 + $0x68] sm:$0xff] %v633
        %773 = vst [vmem:[%s188 + $0x70] sm:$0xff] %v635
        %774 = vst [vmem:[%s188 + $0x78] sm:$0xff] %v637
        %775 = vst [vmem:[%s188 + $0x80] sm:$0xff] %v641
        %776 = vst [vmem:[%s188 + $0x88] sm:$0xff] %v643
        %777 = vst [vmem:[%s188 + $0x90] sm:$0xff] %v645
        %778 = vst [vmem:[%s188 + $0x98] sm:$0xff] %v647
        %779 = vst [vmem:[%s188 + $0xa0] sm:$0xff] %v651
        %780 = vst [vmem:[%s188 + $0xa8] sm:$0xff] %v653
        %781 = vst [vmem:[%s188 + $0xb0] sm:$0xff] %v655
        %782 = vst [vmem:[%s188 + $0xb8] sm:$0xff] %v657
        %783 = vst [vmem:[%s188 + $0xc0] sm:$0xff] %v661
        %784 = vst [vmem:[%s188 + $0xc8] sm:$0xff] %v663
        %785 = vst [vmem:[%s188 + $0xd0] sm:$0xff] %v665
        %786 = vst [vmem:[%s188 + $0xd8] sm:$0xff] %v667
        %787 = vst [vmem:[%s188 + $0xe0] sm:$0xff] %v671
        %788 = vst [vmem:[%s188 + $0xe8] sm:$0xff] %v673
        %789 = vst [vmem:[%s188 + $0xf0] sm:$0xff] %v675
        %790 = vst [vmem:[%s188 + $0xf8] sm:$0xff] %v677
        %791 = vst [vmem:[%s188 + $0x100] sm:$0xff] %v681
        %792 = vst [vmem:[%s188 + $0x108] sm:$0xff] %v683
        %793 = vst [vmem:[%s188 + $0x110] sm:$0xff] %v685
        %794 = vst [vmem:[%s188 + $0x118] sm:$0xff] %v687
        %795 = vst [vmem:[%s188 + $0x120] sm:$0xff] %v691
        %796 = vst [vmem:[%s188 + $0x128] sm:$0xff] %v693
        %797 = vst [vmem:[%s188 + $0x130] sm:$0xff] %v695
        %798 = vst [vmem:[%s188 + $0x138] sm:$0xff] %v697
        %799 = vst [vmem:[%s188 + $0x140] sm:$0xff] %v701
        %800 = vst [vmem:[%s188 + $0x148] sm:$0xff] %v703
        %801 = vst [vmem:[%s188 + $0x150] sm:$0xff] %v705
        %802 = vst [vmem:[%s188 + $0x158] sm:$0xff] %v707
        %803 = vst [vmem:[%s188 + $0x160] sm:$0xff] %v711
        %804 = vst [vmem:[%s188 + $0x168] sm:$0xff] %v713
        %805 = vst [vmem:[%s188 + $0x170] sm:$0xff] %v715
        %806 = vst [vmem:[%s188 + $0x178] sm:$0xff] %v717
        %807 = vst [vmem:[%s188 + $0x180] sm:$0xff] %v721
        %808 = vst [vmem:[%s188 + $0x188] sm:$0xff] %v723
        %809 = vst [vmem:[%s188 + $0x190] sm:$0xff] %v725
        %810 = vst [vmem:[%s188 + $0x198] sm:$0xff] %v727
        %811 = vst [vmem:[%s188 + $0x1a0] sm:$0xff] %v731
        %812 = vst [vmem:[%s188 + $0x1a8] sm:$0xff] %v733
        %813 = vst [vmem:[%s188 + $0x1b0] sm:$0xff] %v735
        %814 = vst [vmem:[%s188 + $0x1b8] sm:$0xff] %v737
        %815 = vst [vmem:[%s188 + $0x1c0] sm:$0xff] %v741
        %816 = vst [vmem:[%s188 + $0x1c8] sm:$0xff] %v743
        %817 = vst [vmem:[%s188 + $0x1d0] sm:$0xff] %v745
        %818 = vst [vmem:[%s188 + $0x1d8] sm:$0xff] %v747
        %819 = vst [vmem:[%s188 + $0x1e0] sm:$0xff] %v751
        %820 = vst [vmem:[%s188 + $0x1e8] sm:$0xff] %v753
        %821 = vst [vmem:[%s188 + $0x1f0] sm:$0xff] %v755
        %822 = vst [vmem:[%s188 + $0x1f8] sm:$0xff] %v757
        %s823 = sand.u32 %s109, 1
        %s824 = scalar_lea.sflag [#allocation3], %s823
        %s825 = sand.u32 %s109, 1
        %s826 = smul.addr %s825, 512
        %s827 = scalar_lea.vmem [#allocation2], %s826
        // Predicated region
        $region33: #{tpu_custom_call.1} parent=31 // pred_check
          %p828 = pneg %p119
        $region34: #{tpu_custom_call.1} parent=31 // pred_check_branch
          %830 = sbr.rel (%p828) target = $region36
        $region35: #{tpu_custom_call.1} parent=31 // pred_region
          %s831 = smul.u32 2, %s22
          %s833 = ssub.s32 8192, 8192
          %834 = vsyncadd %s824, %s833
          %s835 = smul.addr %s21, 64
          %s836 = sadd.s32 %s831, %s835
          %s837 = smul.addr %s836, 128
          %s838 = scalar_lea.hbm %s3, %s837
          %s839 = sshll.u32 %s827, 4
          %s840 = int_to_ptr.vmem [resolvable:$true] %s839
          %845 = dma.vmem_to_hbm [thread:$0]  %s840, 8192, %s838, %s824, 256, 256, 16
        $region36: #{tpu_custom_call.1} parent=31 // pred_fallthru
          _
      $region32: #{tpu_custom_call.1} parent=5 // pred_fallthru
        _
      %p846 = scmp.le.s32.totalorder 2, %s12
      // Predicated region
      $region37: #{tpu_custom_call.1} parent=5 // pred_check
        %p847 = pneg %p846
      $region38: #{tpu_custom_call.1} parent=5 // pred_check_branch
        %849 = sbr.rel (%p847) target = $region40
      $region39: #{tpu_custom_call.1} parent=5 // pred_region
        %s850 = ssub.s32 %s12, 2
        // Predicated region
        $region41: #{tpu_custom_call.1} parent=39 // pred_check
          %p851 = pneg %p125
        $region42: #{tpu_custom_call.1} parent=39 // pred_check_branch
          %853 = sbr.rel (%p851) target = $region44
        $region43: #{tpu_custom_call.1} parent=39 // pred_region
          %s854 = sand.u32 %s110, 1
          %s855 = scalar_lea.sflag [#allocation3], %s854
          %s856 = sand.u32 %s110, 1
          %s857 = smul.addr %s856, 512
          %s858 = scalar_lea.vmem [#allocation2], %s857
          %859 = dma.done %s855, 8192
        $region44: #{tpu_custom_call.1} parent=39 // pred_fallthru
          _
      $region40: #{tpu_custom_call.1} parent=5 // pred_fallthru
        _
    $region6: #{tpu_custom_call.1} parent=1 // loop_footer
      %s16 = sadd.s32 1, %s12
    $region7: #{tpu_custom_call.1} parent=1 // loop_footer_branch
      %11 = sbr.rel target = $region3
    $region8: #{tpu_custom_call.1} parent=1 // loop_exit
      _
    %860 = vsyncpa [#allocation3], 1
    %s861 = scalar_lea.sflag [#allocation3], 1
    %862 = vsyncpa %s861, 1

</llo_original>
